<compile_context>
chip_gen: v5e
topology: v5e:2x2
jax: 0.10.0
libtpu: 0.0.40
codegen_flags: <defaults>
</compile_context>

<pallas_src>
import math

import jax
import jax.numpy as jnp
from jax.experimental import pallas as pl
from jax.experimental.pallas import tpu as pltpu

H1 = 128          # hidden layer 1 size (per head)
H2 = 64           # hidden layer 2 size (per head)
FUSED_H1 = 2 * H1  # 256 : [policy_h1 | value_h1]
FUSED_H2 = 2 * H2  # 128 : [policy_h2 | value_h2]
OUT_LANES = 128    # lane-dense output slab width (p_mean | v | zero padding)


def _fused_mlp_kernel(x_ref, w1_ref, b1_ref, w2_ref, b2_ref, w3_ref, b3_ref, out_ref):
    x = x_ref[...]
    h = jnp.dot(x, w1_ref[...], preferred_element_type=jnp.float32) + b1_ref[...]
    h = jnp.maximum(h, 0.0)
    h = jnp.dot(h, w2_ref[...], preferred_element_type=jnp.float32) + b2_ref[...]
    h = jnp.maximum(h, 0.0)
    out_ref[...] = (
        jnp.dot(h, w3_ref[...], preferred_element_type=jnp.float32) + b3_ref[...]
    )


def _round_up(n, m):
    return ((n + m - 1) // m) * m


def pack_fused_params(params, num_actions):
    """Pack the per-head torch-style params into fused, MXU/lane-friendly arrays.

    Done once (outside the hot path); the block-diagonal zeros keep the two heads
    mathematically independent, so the fused forward is exactly equivalent.
    """
    A = num_actions
    assert A + 1 <= OUT_LANES, "num_actions must fit in the 128-lane output slab"

    w1f = jnp.concatenate([params["policy_w1"], params["value_w1"]], axis=1)  # [S, 256]
    b1f = jnp.concatenate([params["policy_b1"], params["value_b1"]], axis=1)  # [1, 256]

    w2f = jnp.zeros((FUSED_H1, FUSED_H2), jnp.float32)
    w2f = w2f.at[:H1, :H2].set(params["policy_w2"])
    w2f = w2f.at[H1:, H2:].set(params["value_w2"])                            # [256, 128]
    b2f = jnp.concatenate([params["policy_b2"], params["value_b2"]], axis=1)  # [1, 128]

    w3f = jnp.zeros((FUSED_H2, OUT_LANES), jnp.float32)
    w3f = w3f.at[:H2, :A].set(params["policy_w3"])
    w3f = w3f.at[H2:, A:A + 1].set(params["value_w3"])                        # [128, 128]
    b3f = jnp.zeros((1, OUT_LANES), jnp.float32)
    b3f = b3f.at[:, :A].set(params["policy_b3"])
    b3f = b3f.at[:, A:A + 1].set(params["value_b3"])                          # [1, 128]

    return {
        "w1f": w1f, "b1f": b1f,
        "w2f": w2f, "b2f": b2f,
        "w3f": w3f, "b3f": b3f,
        "log_std": params["log_std"],   # [1, A]
        "num_actions": A,
    }


def ppo_model_forward(x, fused, *, batch_tile=512):
    """Fused policy+value MLP forward.

    Args:
      x: [B, num_states] float32
      fused: output of pack_fused_params
      batch_tile: rows per grid step for large rollout batches.

    Returns:
      (p_mean [B, A], p_std [B, A], v [B, 1])
    """
    B, S = x.shape
    A = fused["num_actions"]

    # Pad batch to a multiple of 8 (f32 sublane granule); tile only for big batches.
    bt = batch_tile if B >= batch_tile else _round_up(B, 8)
    Bp = _round_up(B, bt)
    if Bp != B:
        x = jnp.pad(x, ((0, Bp - B), (0, 0)))
    grid = (Bp // bt,)

    # TODO(synk): for very large rollout batches on v6e/v7x, cast x / weights to
    # bf16 (keeping f32 accumulation) to match the native MXU dtype.
    flops = 2 * Bp * (S * FUSED_H1 + FUSED_H1 * FUSED_H2 + FUSED_H2 * OUT_LANES)
    bytes_accessed = 4 * (
        Bp * S                       # x
        + S * FUSED_H1 + FUSED_H1 * FUSED_H2 + FUSED_H2 * OUT_LANES   # weights
        + FUSED_H1 + FUSED_H2 + OUT_LANES                              # biases
        + Bp * OUT_LANES             # output slab
    )

    out = pl.pallas_call(
        _fused_mlp_kernel,
        out_shape=jax.ShapeDtypeStruct((Bp, OUT_LANES), jnp.float32),
        grid_spec=pltpu.PrefetchScalarGridSpec(
            num_scalar_prefetch=0,
            grid=grid,
            in_specs=[
                pl.BlockSpec((bt, S), lambda i: (i, 0)),                 # x tile
                pl.BlockSpec((S, FUSED_H1), lambda i: (0, 0)),           # W1f (resident)
                pl.BlockSpec((1, FUSED_H1), lambda i: (0, 0)),           # b1f
                pl.BlockSpec((FUSED_H1, FUSED_H2), lambda i: (0, 0)),    # W2f
                pl.BlockSpec((1, FUSED_H2), lambda i: (0, 0)),           # b2f
                pl.BlockSpec((FUSED_H2, OUT_LANES), lambda i: (0, 0)),   # W3f
                pl.BlockSpec((1, OUT_LANES), lambda i: (0, 0)),          # b3f
            ],
            out_specs=pl.BlockSpec((bt, OUT_LANES), lambda i: (i, 0)),
        ),
        compiler_params=pltpu.CompilerParams(
            dimension_semantics=("parallel",),
        ),
        cost_estimate=pl.CostEstimate(
            flops=flops, transcendentals=0, bytes_accessed=bytes_accessed
        ),
    )(x, fused["w1f"], fused["b1f"], fused["w2f"], fused["b2f"],
      fused["w3f"], fused["b3f"])

    p_mean = out[:B, :A]
    v = out[:B, A:A + 1]
    # std = exp(log_std), batch-independent -> computed outside the kernel.
    p_std = jnp.broadcast_to(jnp.exp(fused["log_std"]), p_mean.shape)
    return p_mean, p_std, v


def _xavier_uniform(key, fan_in, fan_out):
    # torch.nn.init.xavier_uniform_ with gain=1: U(-a, a), a = sqrt(6/(fan_in+fan_out))
    bound = math.sqrt(6.0 / (fan_in + fan_out))
    # stored as [in, out] (transposed vs. torch's [out, in])
    return jax.random.uniform(
        key, (fan_in, fan_out), dtype=jnp.float32, minval=-bound, maxval=bound
    )


def init_params(key, num_states, num_actions):
    keys = jax.random.split(key, 6)
    return {
        # Policy head
        "policy_w1": _xavier_uniform(keys[0], num_states, H1),
        "policy_b1": jnp.zeros((1, H1), jnp.float32),
        "policy_w2": _xavier_uniform(keys[1], H1, H2),
        "policy_b2": jnp.zeros((1, H2), jnp.float32),
        "policy_w3": _xavier_uniform(keys[2], H2, num_actions),
        "policy_b3": jnp.zeros((1, num_actions), jnp.float32),
        # log_std parameter (torch: zeros(num_actions))
        "log_std": jnp.zeros((1, num_actions), jnp.float32),
        # Value head
        "value_w1": _xavier_uniform(keys[3], num_states, H1),
        "value_b1": jnp.zeros((1, H1), jnp.float32),
        "value_w2": _xavier_uniform(keys[4], H1, H2),
        "value_b2": jnp.zeros((1, H2), jnp.float32),
        "value_w3": _xavier_uniform(keys[5], H2, 1),
        "value_b3": jnp.zeros((1, 1), jnp.float32),
    }


def _reference_forward(x, p):
    """Pure-JAX reference (mirrors the PyTorch module's forward)."""
    h = jax.nn.relu(x @ p["policy_w1"] + p["policy_b1"])
    h = jax.nn.relu(h @ p["policy_w2"] + p["policy_b2"])
    p_mean = h @ p["policy_w3"] + p["policy_b3"]
    p_std = jnp.broadcast_to(jnp.exp(p["log_std"]), p_mean.shape)
    g = jax.nn.relu(x @ p["value_w1"] + p["value_b1"])
    g = jax.nn.relu(g @ p["value_w2"] + p["value_b2"])
    v = g @ p["value_w3"] + p["value_b3"]
    return p_mean, p_std, v


if __name__ == "__main__":
    num_states = 32
    num_actions = 8
    batch = 2

    key = jax.random.PRNGKey(0)
    k_params, k_x = jax.random.split(key)

    params = init_params(k_params, num_states, num_actions)
    fused = pack_fused_params(params, num_actions)
    x = jax.random.normal(k_x, (batch, num_states), dtype=jnp.float32)

    p_mean, p_std, v = ppo_model_forward(x, fused)
    jax.block_until_ready((p_mean, p_std, v))

    # Sanity check against pure-JAX reference.
    ref_mean, ref_std, ref_v = _reference_forward(x, params)
    assert p_mean.shape == (batch, num_actions)
    assert p_std.shape == (batch, num_actions)
    assert v.shape == (batch, 1)
    assert jnp.allclose(p_mean, ref_mean, atol=1e-5, rtol=1e-5)
    assert jnp.allclose(p_std, ref_std, atol=1e-5, rtol=1e-5)
    assert jnp.allclose(v, ref_v, atol=1e-5, rtol=1e-5)

    print("KERNEL_OK")
</pallas_src>

<mosaic_0001>
module attributes {stable_mosaic.version = 11 : i64} {
  func.func @_fused_mlp_kernel(%arg0: i32, %arg1: memref<8x32xf32, #tpu.memory_space<vmem>>, %arg2: memref<32x256xf32, #tpu.memory_space<vmem>>, %arg3: memref<1x256xf32, #tpu.memory_space<vmem>>, %arg4: memref<256x128xf32, #tpu.memory_space<vmem>>, %arg5: memref<1x128xf32, #tpu.memory_space<vmem>>, %arg6: memref<128x128xf32, #tpu.memory_space<vmem>>, %arg7: memref<1x128xf32, #tpu.memory_space<vmem>>, %arg8: memref<8x128xf32, #tpu.memory_space<vmem>>) attributes {dimension_semantics = [#tpu.dimension_semantics<parallel>], iteration_bounds = array<i64: 1>, scalar_prefetch = 0 : i64, scratch_operands = 0 : i64, tpu.core_type = #tpu.core_type<tc>, window_params = [{transform_indices = @transform_0, window_bounds = array<i64: 8, 32>}, {pipeline_mode = #tpu.pipeline_mode<synchronous>, transform_indices = @transform_1, window_bounds = array<i64: 32, 256>}, {pipeline_mode = #tpu.pipeline_mode<synchronous>, transform_indices = @transform_2, window_bounds = array<i64: 1, 256>}, {pipeline_mode = #tpu.pipeline_mode<synchronous>, transform_indices = @transform_3, window_bounds = array<i64: 256, 128>}, {pipeline_mode = #tpu.pipeline_mode<synchronous>, transform_indices = @transform_4, window_bounds = array<i64: 1, 128>}, {pipeline_mode = #tpu.pipeline_mode<synchronous>, transform_indices = @transform_5, window_bounds = array<i64: 128, 128>}, {pipeline_mode = #tpu.pipeline_mode<synchronous>, transform_indices = @transform_6, window_bounds = array<i64: 1, 128>}, {transform_indices = @transform_7, window_bounds = array<i64: 8, 128>}]} {
    %c0 = arith.constant 0 : index
    %c0_0 = arith.constant 0 : index
    %0 = vector.load %arg1[%c0, %c0_0] : memref<8x32xf32, #tpu.memory_space<vmem>>, vector<8x32xf32>
    %c0_1 = arith.constant 0 : index
    %c0_2 = arith.constant 0 : index
    %1 = vector.load %arg2[%c0_1, %c0_2] : memref<32x256xf32, #tpu.memory_space<vmem>>, vector<32x256xf32>
    %cst = arith.constant dense<0.000000e+00> : vector<8x256xf32>
    %2 = tpu.matmul %0, %1, %cst {dimension_numbers = #tpu.dot_dimension_numbers<[1], [0], [0], [1], [0, 0, 1, 1], [], []>} : vector<8x32xf32>, vector<32x256xf32>, vector<8x256xf32> -> vector<8x256xf32>
    %c0_3 = arith.constant 0 : index
    %c0_4 = arith.constant 0 : index
    %3 = vector.load %arg3[%c0_3, %c0_4] : memref<1x256xf32, #tpu.memory_space<vmem>>, vector<1x256xf32>
    %4 = vector.broadcast %3 : vector<1x256xf32> to vector<8x256xf32>
    %5 = arith.addf %2, %4 : vector<8x256xf32>
    %cst_5 = arith.constant 0.000000e+00 : f32
    %6 = vector.broadcast %cst_5 : f32 to vector<8x256xf32>
    %7 = arith.maximumf %5, %6 : vector<8x256xf32>
    %c0_6 = arith.constant 0 : index
    %c0_7 = arith.constant 0 : index
    %8 = vector.load %arg4[%c0_6, %c0_7] : memref<256x128xf32, #tpu.memory_space<vmem>>, vector<256x128xf32>
    %cst_8 = arith.constant dense<0.000000e+00> : vector<8x128xf32>
    %9 = tpu.matmul %7, %8, %cst_8 {dimension_numbers = #tpu.dot_dimension_numbers<[1], [0], [0], [1], [0, 0, 1, 1], [], []>} : vector<8x256xf32>, vector<256x128xf32>, vector<8x128xf32> -> vector<8x128xf32>
    %c0_9 = arith.constant 0 : index
    %c0_10 = arith.constant 0 : index
    %10 = vector.load %arg5[%c0_9, %c0_10] : memref<1x128xf32, #tpu.memory_space<vmem>>, vector<1x128xf32>
    %11 = vector.broadcast %10 : vector<1x128xf32> to vector<8x128xf32>
    %12 = arith.addf %9, %11 : vector<8x128xf32>
    %cst_11 = arith.constant 0.000000e+00 : f32
    %13 = vector.broadcast %cst_11 : f32 to vector<8x128xf32>
    %14 = arith.maximumf %12, %13 : vector<8x128xf32>
    %c0_12 = arith.constant 0 : index
    %c0_13 = arith.constant 0 : index
    %15 = vector.load %arg6[%c0_12, %c0_13] : memref<128x128xf32, #tpu.memory_space<vmem>>, vector<128x128xf32>
    %cst_14 = arith.constant dense<0.000000e+00> : vector<8x128xf32>
    %16 = tpu.matmul %14, %15, %cst_14 {dimension_numbers = #tpu.dot_dimension_numbers<[1], [0], [0], [1], [0, 0, 1, 1], [], []>} : vector<8x128xf32>, vector<128x128xf32>, vector<8x128xf32> -> vector<8x128xf32>
    %c0_15 = arith.constant 0 : index
    %c0_16 = arith.constant 0 : index
    %17 = vector.load %arg7[%c0_15, %c0_16] : memref<1x128xf32, #tpu.memory_space<vmem>>, vector<1x128xf32>
    %18 = vector.broadcast %17 : vector<1x128xf32> to vector<8x128xf32>
    %19 = arith.addf %16, %18 : vector<8x128xf32>
    %c0_17 = arith.constant 0 : index
    %c0_18 = arith.constant 0 : index
    %20 = vector.load %arg8[%c0_17, %c0_18] : memref<8x128xf32, #tpu.memory_space<vmem>>, vector<8x128xf32>
    tpu.vector_store %arg8[%c0_17, %c0_18], %19 {strides = array<i32>} : memref<8x128xf32, #tpu.memory_space<vmem>>, vector<8x128xf32>,
    return
  }
  func.func @transform_0(%arg0: i32) -> (i32, i32) {
    %c0_i32 = arith.constant 0 : i32
    %c0_i32_0 = arith.constant 0 : i32
    return %arg0, %c0_i32 : i32, i32
  }
  func.func @transform_1(%arg0: i32) -> (i32, i32) {
    %c0_i32 = arith.constant 0 : i32
    %c0_i32_0 = arith.constant 0 : i32
    %c0_i32_1 = arith.constant 0 : i32
    return %c0_i32, %c0_i32_0 : i32, i32
  }
  func.func @transform_2(%arg0: i32) -> (i32, i32) {
    %c0_i32 = arith.constant 0 : i32
    %c0_i32_0 = arith.constant 0 : i32
    %c0_i32_1 = arith.constant 0 : i32
    return %c0_i32, %c0_i32_0 : i32, i32
  }
  func.func @transform_3(%arg0: i32) -> (i32, i32) {
    %c0_i32 = arith.constant 0 : i32
    %c0_i32_0 = arith.constant 0 : i32
    %c0_i32_1 = arith.constant 0 : i32
    return %c0_i32, %c0_i32_0 : i32, i32
  }
  func.func @transform_4(%arg0: i32) -> (i32, i32) {
    %c0_i32 = arith.constant 0 : i32
    %c0_i32_0 = arith.constant 0 : i32
    %c0_i32_1 = arith.constant 0 : i32
    return %c0_i32, %c0_i32_0 : i32, i32
  }
  func.func @transform_5(%arg0: i32) -> (i32, i32) {
    %c0_i32 = arith.constant 0 : i32
    %c0_i32_0 = arith.constant 0 : i32
    %c0_i32_1 = arith.constant 0 : i32
    return %c0_i32, %c0_i32_0 : i32, i32
  }
  func.func @transform_6(%arg0: i32) -> (i32, i32) {
    %c0_i32 = arith.constant 0 : i32
    %c0_i32_0 = arith.constant 0 : i32
    %c0_i32_1 = arith.constant 0 : i32
    return %c0_i32, %c0_i32_0 : i32, i32
  }
  func.func @transform_7(%arg0: i32) -> (i32, i32) {
    %c0_i32 = arith.constant 0 : i32
    %c0_i32_0 = arith.constant 0 : i32
    return %arg0, %c0_i32 : i32, i32
  }
}

</mosaic_0001>

<llo_original>
// kernel: tpu_custom_call.1
$region0: #{tpu_custom_call.1}
  #allocation0 [shape = 'u32[]', space=smem, size = 0x4, offset = 0x4, fixed_abs, tag = 'smem constant byte address 0x4 - core index']
  #allocation1 [shape = 'u32[72,128]{1,0:T(1,128)}', space=vmem, size = 0x9000, scoped, tag = 'internal scratch']
  %s0 = inlined_call_operand.hbm [shape: f32[8,32], index: 0, kind: input, shape index: {}]
  %s1 = inlined_call_operand.hbm [shape: f32[32,256], index: 1, kind: input, shape index: {}]
  %s2 = inlined_call_operand.hbm [shape: f32[1,256], index: 2, kind: input, shape index: {}]
  %s3 = inlined_call_operand.hbm [shape: f32[256,128], index: 3, kind: input, shape index: {}]
  %s4 = inlined_call_operand.vmem [shape: f32[1,128], index: 4, kind: input, shape index: {}]
  %s5 = inlined_call_operand.hbm [shape: f32[128,128], index: 5, kind: input, shape index: {}]
  %s6 = inlined_call_operand.vmem [shape: f32[1,128], index: 6, kind: input, shape index: {}]
  %s7 = inlined_call_operand.hbm [shape: f32[8,128], index: 7, kind: output, shape index: {}]
  %s8 = sld [smem:[#allocation0]]
  $region58: #{tpu_custom_call.1} parent=0
    _
  %s10 = ssub.s32 1, %s8
  %s11 = scalar_select 0, %s10, %s8
  $region1: #{tpu_custom_call.1} parent=0
    #allocation2 [shape = 'u8[4096]{0}', space=vmem, size = 0x1000, scoped, tag = 'input window, operand 0, single buffered']
    #allocation3 [shape = 's32[1]{0}', space=sflag, size = 0x4, scoped, tag = 'scoped memory for tpu_custom_call.1']
    #allocation4 [shape = 's32[1]{0}', space=sflag, size = 0x4, scoped, tag = 'scoped memory for tpu_custom_call.1']
    #allocation5 [shape = 'u8[32768]{0}', space=vmem, size = 0x8000, scoped, tag = 'input window, operand 1, single buffered']
    #allocation6 [shape = 's32[1]{0}', space=sflag, size = 0x4, scoped, tag = 'scoped memory for tpu_custom_call.1']
    #allocation7 [shape = 'u8[1024]{0}', space=vmem, size = 0x400, scoped, tag = 'input window, operand 2, single buffered']
    #allocation8 [shape = 'u8[131072]{0}', space=vmem, size = 0x20000, scoped, tag = 'input window, operand 3, single buffered']
    #allocation9 [shape = 's32[1]{0}', space=sflag, size = 0x4, scoped, tag = 'scoped memory for tpu_custom_call.1']
    #allocation10 [shape = 'u8[65536]{0}', space=vmem, size = 0x10000, scoped, tag = 'input window, operand 5, single buffered']
    #allocation11 [shape = 'u8[4096]{0}', space=vmem, size = 0x1000, scoped, tag = 'output window, operand 0, single buffered']
    %12 = vsyncpa [#allocation3], 0
    %13 = vsyncpa [#allocation6], 0
    %14 = vsyncpa [#allocation9], 0
    %15 = vsyncpa [#allocation4], 0
    // Predicated region
    $region2: #{tpu_custom_call.1} parent=1 // pred_check
      _
    $region3: #{tpu_custom_call.1} parent=1 // pred_check_branch
      %17 = sbr.rel (0) target = $region5
    $region4: #{tpu_custom_call.1} parent=1 // pred_region
      %19 = vsyncadd [#allocation3], 0
      %s21 = sshll.u32 %s0, 4
      %s22 = int_to_ptr.hbm [resolvable:$true] %s21
      %s23 = sshll.u32 [#allocation2], 4
      %s24 = int_to_ptr.vmem [resolvable:$true] %s23
      %26 = dma.hbm_to_vmem [thread:$0]  %s22, 128, %s24, [#allocation3]
    $region5: #{tpu_custom_call.1} parent=1 // pred_fallthru
      _
    // Predicated region
    $region6: #{tpu_custom_call.1} parent=1 // pred_check
      _
    $region7: #{tpu_custom_call.1} parent=1 // pred_check_branch
      %28 = sbr.rel (0) target = $region9
    $region8: #{tpu_custom_call.1} parent=1 // pred_region
      %30 = vsyncadd [#allocation6], 0
      %s31 = sshll.u32 %s1, 4
      %s32 = int_to_ptr.hbm [resolvable:$true] %s31
      %s33 = sshll.u32 [#allocation5], 4
      %s34 = int_to_ptr.vmem [resolvable:$true] %s33
      %39 = dma.hbm_to_vmem [thread:$0]  %s32, 1024, %s34, [#allocation6], 256, 256, 16
    $region9: #{tpu_custom_call.1} parent=1 // pred_fallthru
      _
    // Predicated region
    $region10: #{tpu_custom_call.1} parent=1 // pred_check
      _
    $region11: #{tpu_custom_call.1} parent=1 // pred_check_branch
      %41 = sbr.rel (0) target = $region13
    $region12: #{tpu_custom_call.1} parent=1 // pred_region
      %43 = vsyncadd [#allocation6], 0
      %s45 = sshll.u32 %s2, 4
      %s46 = int_to_ptr.hbm [resolvable:$true] %s45
      %s47 = sshll.u32 [#allocation7], 4
      %s48 = int_to_ptr.vmem [resolvable:$true] %s47
      %50 = dma.hbm_to_vmem [thread:$0]  %s46, 32, %s48, [#allocation6]
    $region13: #{tpu_custom_call.1} parent=1 // pred_fallthru
      _
    // Predicated region
    $region14: #{tpu_custom_call.1} parent=1 // pred_check
      _
    $region15: #{tpu_custom_call.1} parent=1 // pred_check_branch
      %52 = sbr.rel (0) target = $region17
    $region16: #{tpu_custom_call.1} parent=1 // pred_region
      %54 = vsyncadd [#allocation9], 0
      %s55 = sshll.u32 %s3, 4
      %s56 = int_to_ptr.hbm [resolvable:$true] %s55
      %s57 = sshll.u32 [#allocation8], 4
      %s58 = int_to_ptr.vmem [resolvable:$true] %s57
      %63 = dma.hbm_to_vmem [thread:$0]  %s56, 4096, %s58, [#allocation9], 128, 128, 8
    $region17: #{tpu_custom_call.1} parent=1 // pred_fallthru
      _
    // Predicated region
    $region18: #{tpu_custom_call.1} parent=1 // pred_check
      _
    $region19: #{tpu_custom_call.1} parent=1 // pred_check_branch
      %65 = sbr.rel (0) target = $region21
    $region20: #{tpu_custom_call.1} parent=1 // pred_region
      _
    $region21: #{tpu_custom_call.1} parent=1 // pred_fallthru
      _
    // Predicated region
    $region22: #{tpu_custom_call.1} parent=1 // pred_check
      _
    $region23: #{tpu_custom_call.1} parent=1 // pred_check_branch
      %67 = sbr.rel (0) target = $region25
    $region24: #{tpu_custom_call.1} parent=1 // pred_region
      %69 = vsyncadd [#allocation9], 0
      %s70 = sshll.u32 %s5, 4
      %s71 = int_to_ptr.hbm [resolvable:$true] %s70
      %s72 = sshll.u32 [#allocation10], 4
      %s73 = int_to_ptr.vmem [resolvable:$true] %s72
      %78 = dma.hbm_to_vmem [thread:$0]  %s71, 2048, %s73, [#allocation9], 128, 128, 8
    $region25: #{tpu_custom_call.1} parent=1 // pred_fallthru
      _
    // Predicated region
    $region26: #{tpu_custom_call.1} parent=1 // pred_check
      _
    $region27: #{tpu_custom_call.1} parent=1 // pred_check_branch
      %80 = sbr.rel (0) target = $region29
    $region28: #{tpu_custom_call.1} parent=1 // pred_region
      _
    $region29: #{tpu_custom_call.1} parent=1 // pred_fallthru
      _
    // Predicated region
    $region30: #{tpu_custom_call.1} parent=1 // pred_check
      _
    $region31: #{tpu_custom_call.1} parent=1 // pred_check_branch
      %82 = sbr.rel (0) target = $region33
    $region32: #{tpu_custom_call.1} parent=1 // pred_region
      %84 = dma.done [#allocation3], 128
    $region33: #{tpu_custom_call.1} parent=1 // pred_fallthru
      _
    // Predicated region
    $region34: #{tpu_custom_call.1} parent=1 // pred_check
      _
    $region35: #{tpu_custom_call.1} parent=1 // pred_check_branch
      %86 = sbr.rel (0) target = $region37
    $region36: #{tpu_custom_call.1} parent=1 // pred_region
      %88 = dma.done [#allocation6], 1024
    $region37: #{tpu_custom_call.1} parent=1 // pred_fallthru
      _
    // Predicated region
    $region38: #{tpu_custom_call.1} parent=1 // pred_check
      _
    $region39: #{tpu_custom_call.1} parent=1 // pred_check_branch
      %90 = sbr.rel (0) target = $region41
    $region40: #{tpu_custom_call.1} parent=1 // pred_region
      %92 = dma.done [#allocation6], 32
    $region41: #{tpu_custom_call.1} parent=1 // pred_fallthru
      _
    // Predicated region
    $region42: #{tpu_custom_call.1} parent=1 // pred_check
      _
    $region43: #{tpu_custom_call.1} parent=1 // pred_check_branch
      %94 = sbr.rel (0) target = $region45
    $region44: #{tpu_custom_call.1} parent=1 // pred_region
      %96 = dma.done [#allocation9], 4096
    $region45: #{tpu_custom_call.1} parent=1 // pred_fallthru
      _
    // Predicated region
    $region46: #{tpu_custom_call.1} parent=1 // pred_check
      _
    $region47: #{tpu_custom_call.1} parent=1 // pred_check_branch
      %98 = sbr.rel (0) target = $region49
    $region48: #{tpu_custom_call.1} parent=1 // pred_region
      %100 = dma.done [#allocation9], 2048
    $region49: #{tpu_custom_call.1} parent=1 // pred_fallthru
      _
    %v101 = vld [vmem:[#allocation2] sm:$0xff]
    %v102 = vld [vmem:[#allocation5] sm:$0xff]
    %v103 = vld [vmem:[#allocation5 + $0x8] sm:$0xff]
    %v104 = vld [vmem:[#allocation5 + $0x10] sm:$0xff]
    %v105 = vld [vmem:[#allocation5 + $0x18] sm:$0xff]
    %v106 = vld [vmem:[#allocation5 + $0x20] sm:$0xff]
    %v107 = vld [vmem:[#allocation5 + $0x28] sm:$0xff]
    %v108 = vld [vmem:[#allocation5 + $0x30] sm:$0xff]
    %v109 = vld [vmem:[#allocation5 + $0x38] sm:$0xff]
    %v110 = vld [vmem:[#allocation7] sm:$0x3]
    %v112 = vperm.slane %v110, 0
    %v113 = vperm.slane %v110, 1
    %vm116 = vcmask 261120
    %v118 = vsel %vm116, %v101, 0
    %120 = vmatpush.msra.mxu0 0.0
    %121 = vmatpush.msra.mxu0 0.0
    %122 = vmatpush.msra.mxu0 0.0
    %123 = vmatpush.msra.mxu0 0.0
    %124 = vmatpush.msra.mxu0 0.0
    %125 = vmatpush.msra.mxu0 0.0
    %126 = vmatpush.msra.mxu0 0.0
    %127 = vmatpush.msra.mxu0 0.0
    %128 = vmatpush.msra.mxu0 0.0
    %129 = vmatpush.msra.mxu0 0.0
    %130 = vmatpush.msra.mxu0 0.0
    %131 = vmatpush.msra.mxu0 0.0
    %132 = vmatpush.msra.mxu0 %v108
    %133 = vmatpush.msra.mxu0 %v106
    %134 = vmatpush.msra.mxu0 %v104
    %135 = vmatpush.msra.mxu0 %v102
    %136 = vmatmul.f32.gmra.mxu0 %v118
    %v137 = vpop.f32.mrf.mxu0
    %v138 = vadd.f32 %v112, %v137
    %139 = vdwg.mxu0
    %140 = vmatpush.msra.mxu0 0.0
    %141 = vmatpush.msra.mxu0 0.0
    %142 = vmatpush.msra.mxu0 0.0
    %143 = vmatpush.msra.mxu0 0.0
    %144 = vmatpush.msra.mxu0 0.0
    %145 = vmatpush.msra.mxu0 0.0
    %146 = vmatpush.msra.mxu0 0.0
    %147 = vmatpush.msra.mxu0 0.0
    %148 = vmatpush.msra.mxu0 0.0
    %149 = vmatpush.msra.mxu0 0.0
    %150 = vmatpush.msra.mxu0 0.0
    %151 = vmatpush.msra.mxu0 0.0
    %152 = vmatpush.msra.mxu0 %v109
    %153 = vmatpush.msra.mxu0 %v107
    %154 = vmatpush.msra.mxu0 %v105
    %155 = vmatpush.msra.mxu0 %v103
    %156 = vmatmul.f32.gmra.mxu0 %v118
    %v157 = vpop.f32.mrf.mxu0
    %v158 = vadd.f32 %v113, %v157
    %159 = vdwg.mxu0
    %v160 = vmax.f32 %v138, 0.0
    %v161 = vmax.f32 %v158, 0.0
    %v162 = vld [vmem:[#allocation8] sm:$0xff]
    %v163 = vld [vmem:[#allocation8 + $0x8] sm:$0xff]
    %v164 = vld [vmem:[#allocation8 + $0x10] sm:$0xff]
    %v165 = vld [vmem:[#allocation8 + $0x18] sm:$0xff]
    %v166 = vld [vmem:[#allocation8 + $0x20] sm:$0xff]
    %v167 = vld [vmem:[#allocation8 + $0x28] sm:$0xff]
    %v168 = vld [vmem:[#allocation8 + $0x30] sm:$0xff]
    %v169 = vld [vmem:[#allocation8 + $0x38] sm:$0xff]
    %v170 = vld [vmem:[#allocation8 + $0x40] sm:$0xff]
    %v171 = vld [vmem:[#allocation8 + $0x48] sm:$0xff]
    %v172 = vld [vmem:[#allocation8 + $0x50] sm:$0xff]
    %v173 = vld [vmem:[#allocation8 + $0x58] sm:$0xff]
    %v174 = vld [vmem:[#allocation8 + $0x60] sm:$0xff]
    %v175 = vld [vmem:[#allocation8 + $0x68] sm:$0xff]
    %v176 = vld [vmem:[#allocation8 + $0x70] sm:$0xff]
    %v177 = vld [vmem:[#allocation8 + $0x78] sm:$0xff]
    %v178 = vld [vmem:[#allocation8 + $0x80] sm:$0xff]
    %v179 = vld [vmem:[#allocation8 + $0x88] sm:$0xff]
    %v180 = vld [vmem:[#allocation8 + $0x90] sm:$0xff]
    %v181 = vld [vmem:[#allocation8 + $0x98] sm:$0xff]
    %v182 = vld [vmem:[#allocation8 + $0xa0] sm:$0xff]
    %v183 = vld [vmem:[#allocation8 + $0xa8] sm:$0xff]
    %v184 = vld [vmem:[#allocation8 + $0xb0] sm:$0xff]
    %v185 = vld [vmem:[#allocation8 + $0xb8] sm:$0xff]
    %v186 = vld [vmem:[#allocation8 + $0xc0] sm:$0xff]
    %v187 = vld [vmem:[#allocation8 + $0xc8] sm:$0xff]
    %v188 = vld [vmem:[#allocation8 + $0xd0] sm:$0xff]
    %v189 = vld [vmem:[#allocation8 + $0xd8] sm:$0xff]
    %v190 = vld [vmem:[#allocation8 + $0xe0] sm:$0xff]
    %v191 = vld [vmem:[#allocation8 + $0xe8] sm:$0xff]
    %v192 = vld [vmem:[#allocation8 + $0xf0] sm:$0xff]
    %v193 = vld [vmem:[#allocation8 + $0xf8] sm:$0xff]
    %v194 = vld [vmem:[%s4] sm:$0x1]
    %v196 = vperm.slane %v194, 0
    %198 = vmatpush.msra.mxu0 %v177
    %199 = vmatpush.msra.mxu0 %v176
    %200 = vmatpush.msra.mxu0 %v175
    %201 = vmatpush.msra.mxu0 %v174
    %202 = vmatpush.msra.mxu0 %v173
    %203 = vmatpush.msra.mxu0 %v172
    %204 = vmatpush.msra.mxu0 %v171
    %205 = vmatpush.msra.mxu0 %v170
    %206 = vmatpush.msra.mxu0 %v169
    %207 = vmatpush.msra.mxu0 %v168
    %208 = vmatpush.msra.mxu0 %v167
    %209 = vmatpush.msra.mxu0 %v166
    %210 = vmatpush.msra.mxu0 %v165
    %211 = vmatpush.msra.mxu0 %v164
    %212 = vmatpush.msra.mxu0 %v163
    %213 = vmatpush.msra.mxu0 %v162
    %214 = vmatmul.f32.gmra.mxu0 %v160
    %v215 = vpop.f32.mrf.mxu0
    %v216 = vadd.f32 %v196, %v215
    %217 = vdwg.mxu0
    %218 = vmatpush.msra.mxu0 %v193
    %219 = vmatpush.msra.mxu0 %v192
    %220 = vmatpush.msra.mxu0 %v191
    %221 = vmatpush.msra.mxu0 %v190
    %222 = vmatpush.msra.mxu0 %v189
    %223 = vmatpush.msra.mxu0 %v188
    %224 = vmatpush.msra.mxu0 %v187
    %225 = vmatpush.msra.mxu0 %v186
    %226 = vmatpush.msra.mxu0 %v185
    %227 = vmatpush.msra.mxu0 %v184
    %228 = vmatpush.msra.mxu0 %v183
    %229 = vmatpush.msra.mxu0 %v182
    %230 = vmatpush.msra.mxu0 %v181
    %231 = vmatpush.msra.mxu0 %v180
    %232 = vmatpush.msra.mxu0 %v179
    %233 = vmatpush.msra.mxu0 %v178
    %234 = vmatmul.f32.gmra.mxu0 %v161
    %v235 = vpop.f32.mrf.mxu0
    %v236 = vadd.f32 %v216, %v235
    %237 = vdwg.mxu0
    %v238 = vmax.f32 %v236, 0.0
    %v239 = vld [vmem:[#allocation10] sm:$0xff]
    %v240 = vld [vmem:[#allocation10 + $0x8] sm:$0xff]
    %v241 = vld [vmem:[#allocation10 + $0x10] sm:$0xff]
    %v242 = vld [vmem:[#allocation10 + $0x18] sm:$0xff]
    %v243 = vld [vmem:[#allocation10 + $0x20] sm:$0xff]
    %v244 = vld [vmem:[#allocation10 + $0x28] sm:$0xff]
    %v245 = vld [vmem:[#allocation10 + $0x30] sm:$0xff]
    %v246 = vld [vmem:[#allocation10 + $0x38] sm:$0xff]
    %v247 = vld [vmem:[#allocation10 + $0x40] sm:$0xff]
    %v248 = vld [vmem:[#allocation10 + $0x48] sm:$0xff]
    %v249 = vld [vmem:[#allocation10 + $0x50] sm:$0xff]
    %v250 = vld [vmem:[#allocation10 + $0x58] sm:$0xff]
    %v251 = vld [vmem:[#allocation10 + $0x60] sm:$0xff]
    %v252 = vld [vmem:[#allocation10 + $0x68] sm:$0xff]
    %v253 = vld [vmem:[#allocation10 + $0x70] sm:$0xff]
    %v254 = vld [vmem:[#allocation10 + $0x78] sm:$0xff]
    %v255 = vld [vmem:[%s6] sm:$0x1]
    %v257 = vperm.slane %v255, 0
    %259 = vmatpush.msra.mxu0 %v254
    %260 = vmatpush.msra.mxu0 %v253
    %261 = vmatpush.msra.mxu0 %v252
    %262 = vmatpush.msra.mxu0 %v251
    %263 = vmatpush.msra.mxu0 %v250
    %264 = vmatpush.msra.mxu0 %v249
    %265 = vmatpush.msra.mxu0 %v248
    %266 = vmatpush.msra.mxu0 %v247
    %267 = vmatpush.msra.mxu0 %v246
    %268 = vmatpush.msra.mxu0 %v245
    %269 = vmatpush.msra.mxu0 %v244
    %270 = vmatpush.msra.mxu0 %v243
    %271 = vmatpush.msra.mxu0 %v242
    %272 = vmatpush.msra.mxu0 %v241
    %273 = vmatpush.msra.mxu0 %v240
    %274 = vmatpush.msra.mxu0 %v239
    %275 = vmatmul.f32.gmra.mxu0 %v238
    %v276 = vpop.f32.mrf.mxu0
    %v277 = vadd.f32 %v257, %v276
    %278 = vdwg.mxu0
    %279 = vst [vmem:[#allocation11] sm:$0xff] %v277
    // Predicated region
    $region50: #{tpu_custom_call.1} parent=1 // pred_check
      _
    $region51: #{tpu_custom_call.1} parent=1 // pred_check_branch
      %281 = sbr.rel (0) target = $region53
    $region52: #{tpu_custom_call.1} parent=1 // pred_region
      %283 = vsyncadd [#allocation4], 0
      %s285 = sshll.u32 [#allocation11], 4
      %s286 = int_to_ptr.vmem [resolvable:$true] %s285
      %s287 = sshll.u32 %s7, 4
      %s288 = int_to_ptr.hbm [resolvable:$true] %s287
      %290 = dma.vmem_to_hbm [thread:$0]  %s286, 128, %s288, [#allocation4]
    $region53: #{tpu_custom_call.1} parent=1 // pred_fallthru
      _
    // Predicated region
    $region54: #{tpu_custom_call.1} parent=1 // pred_check
      _
    $region55: #{tpu_custom_call.1} parent=1 // pred_check_branch
      %292 = sbr.rel (0) target = $region57
    $region56: #{tpu_custom_call.1} parent=1 // pred_region
      %294 = dma.done [#allocation4], 128
    $region57: #{tpu_custom_call.1} parent=1 // pred_fallthru
      _
    %295 = vsyncpa [#allocation3], 1
    %296 = vsyncpa [#allocation6], 1
    %297 = vsyncpa [#allocation9], 1
    %298 = vsyncpa [#allocation4], 1

</llo_original>
